<compile_context>
chip_gen: v6e
topology: v6e:2x2x1
jax: 0.10.0
libtpu: 0.0.40
codegen_flags: <defaults>
</compile_context>

<pallas_src>
import functools

import jax
import jax.numpy as jnp
from jax.experimental import pallas as pl
from jax.experimental.pallas import tpu as pltpu


def _attention_conv_kernel(x_ref, w_ref, rel_ref, mask_ref, out_ref, kv_scr, *,
                           kk, c_out, n, margin, offsets, neg_slope):
    # x_ref   : (1, C_in, N)      image, channels on sublanes / flattened pixels on lanes
    # w_ref   : (3*C_out, C_in)   fused [Wq; Wk; Wv] 1x1-conv weights
    # rel_ref : (C_out, KK)       per-window relative-position bias (single padded tile)
    # mask_ref: (KK, N)           1.0 where the window pixel is inside the image, else 0.0
    # out_ref : (1, C_out, N)
    # kv_scr  : (2*C_out, margin + N + margin)  VMEM scratch holding projected [k; v]

    # Zero the scratch margins (out-of-image reads land here; values are masked anyway,
    # keeping them deterministic costs two aligned stores).
    zeros_margin = jnp.zeros((2 * c_out, margin), dtype=jnp.float32)
    kv_scr[:, :margin] = zeros_margin
    kv_scr[:, margin + n:] = zeros_margin

    # Single fused q/k/v projection for the whole image: ONE MXU push.
    qkv = jnp.dot(w_ref[...], x_ref[0], preferred_element_type=jnp.float32)  # (3C, N)
    q = qkv[:c_out]                                                          # (C, N)
    kv_scr[:, pl.ds(margin, n)] = qkv[c_out:]                                # (2C, N)

    rel_all = rel_ref[...]        # (C_out, KK)  loaded once, hoisted out of the loop
    mask_all = mask_ref[...]      # (KK, N)

    m = None
    denom = None
    acc = None
    for kidx in range(kk):        # KK is small (e.g. 9): fully unrolled
        # Shifted window = static-lane-offset slice of the zero-margined projected slab.
        off = margin + offsets[kidx]
        kv_win = kv_scr[:, pl.ds(off, n)]               # (2C, N)
        valid = mask_all[kidx:kidx + 1, :] > 0.5        # (1, N), broadcast over channels
        # rel bias is added even at padded positions (matches the PyTorch module).
        k = jnp.where(valid, kv_win[:c_out], 0.0) + rel_all[:, kidx:kidx + 1]
        v = jnp.where(valid, kv_win[c_out:], 0.0)
        logit = q * k

        if kidx == 0:             # first window: initialize running stats
            m = logit
            denom = jnp.ones_like(logit)
            acc = v
        else:                     # online (flash-style) softmax update
            m_new = jnp.maximum(m, logit)
            alpha = jnp.exp(m - m_new)
            p = jnp.exp(logit - m_new)
            denom = alpha * denom + p
            acc = alpha * acc + p * v
            m = m_new

    # Approx reciprocal (EUP slot) + one Newton step restores f32 precision cheaply.
    r = pl.reciprocal(denom, approx=True)
    r = r * (2.0 - denom * r)
    out = acc * r
    # LeakyReLU(0.1) as a single max (valid since neg_slope < 1).
    out_ref[0] = jnp.maximum(out, neg_slope * out).astype(out_ref.dtype)


def attention_conv(x, wq, wk, wv, rel_h, rel_w, *,
                   kernel_size=3, stride=1, padding=1, groups=4):
    """Pallas implementation of AttentionConv.forward.

    x       : (B, C_in, H, W)  NCHW, float32
    wq/wk/wv: (C_out, C_in, 1, 1)  1x1 conv weights (PyTorch layout)
    rel_h   : (C_out//2, 1, 1, K, 1)
    rel_w   : (C_out//2, 1, 1, 1, K)
    returns : (B, C_out, H, W)
    """
    B, C_in, H, W = x.shape
    C_out = wq.shape[0]
    K = kernel_size
    KK = K * K
    N = H * W
    # `groups` only reshapes channels in the PyTorch module; the softmax is per-channel,
    # so it does not change the math.
    assert C_out % groups == 0
    H_out = (H + 2 * padding - K) // stride + 1
    W_out = (W + 2 * padding - K) // stride + 1
    # The module implicitly requires same-size output (true for K=3, p=1, s=1).
    assert stride == 1 and H_out == H and W_out == W
    assert padding == (K - 1) // 2

    # ---- wrapper glue: pure layout plumbing (no im2col, no data duplication) ----
    xf = x.astype(jnp.float32)
    x_flat = xf.reshape(B, C_in, N)                                    # (B, C_in, N)

    # fused 1x1-conv weights: (3*C_out, C_in) so the kernel computes w @ x
    w_all = jnp.concatenate([wq.reshape(C_out, C_in),
                             wk.reshape(C_out, C_in),
                             wv.reshape(C_out, C_in)], axis=0).astype(jnp.float32)

    # combined relative-position bias rel_cw[c, kidx] with kidx = kh*K + kw
    half = C_out // 2
    rel_h2 = rel_h.reshape(half, K)                                    # (c, kh)
    rel_w2 = rel_w.reshape(half, K)                                    # (c, kw)
    rel_first = jnp.broadcast_to(rel_h2[:, :, None], (half, K, K))
    rel_second = jnp.broadcast_to(rel_w2[:, None, :], (half, K, K))
    rel_cw = jnp.concatenate([rel_first, rel_second], axis=0)          # (C_out, K, K)
    rel_cw = rel_cw.reshape(C_out, KK).astype(jnp.float32)             # (C_out, KK)

    # per-window border masks + flat lane offsets (static) for the in-kernel windowing
    hh = jnp.arange(H)[:, None]
    ww = jnp.arange(W)[None, :]
    masks = []
    offsets = []
    for kh in range(K):
        for kw in range(K):
            dh, dw = kh - padding, kw - padding
            offsets.append(dh * W + dw)
            valid = (hh + dh >= 0) & (hh + dh < H) & (ww + dw >= 0) & (ww + dw < W)
            masks.append(valid.reshape(-1))
    mask = jnp.stack(masks, axis=0).astype(jnp.float32)                # (KK, N)
    offsets = tuple(offsets)

    # zero margin around the projected k/v slab so every shifted slice stays in bounds;
    # 128-aligned so the centre store is an unmasked aligned vst
    G = ((W + 1 + 127) // 128) * 128

    # ---- hot path: Pallas kernel, grid over batch (parallel -> megacore on v7x) ----
    # TODO(synk): at MVS-scale H*W add a row-tile grid axis (whole rows + 1-row halo) to
    # bound per-step VMEM (halved tile on v7x) and deepen the DMA pipeline.
    kern = functools.partial(_attention_conv_kernel,
                             kk=KK, c_out=C_out, n=N, margin=G,
                             offsets=offsets, neg_slope=0.1)
    out_flat = pl.pallas_call(
        kern,
        out_shape=jax.ShapeDtypeStruct((B, C_out, N), jnp.float32),
        grid=(B,),
        in_specs=[
            pl.BlockSpec((1, C_in, N), lambda b: (b, 0, 0)),
            pl.BlockSpec((3 * C_out, C_in), lambda b: (0, 0)),
            pl.BlockSpec((C_out, KK), lambda b: (0, 0)),
            pl.BlockSpec((KK, N), lambda b: (0, 0)),
        ],
        out_specs=pl.BlockSpec((1, C_out, N), lambda b: (b, 0, 0)),
        scratch_shapes=[pltpu.VMEM((2 * C_out, N + 2 * G), jnp.float32)],
        compiler_params=pltpu.CompilerParams(dimension_semantics=("parallel",)),
    )(x_flat, w_all, rel_cw, mask)

    return out_flat.reshape(B, C_out, H, W)                            # NCHW directly


def _reference(x, wq, wk, wv, rel_h, rel_w, *, K=3, stride=1, padding=1):
    """Pure-JAX transcription of the PyTorch forward (for verification)."""
    B, C_in, H, W = x.shape
    C_out = wq.shape[0]
    xp = jnp.pad(x, ((0, 0), (0, 0), (padding, padding), (padding, padding)))
    q = jnp.einsum('oi,bihw->bohw', wq.reshape(C_out, C_in), x)
    k = jnp.einsum('oi,bihw->bohw', wk.reshape(C_out, C_in), xp)
    v = jnp.einsum('oi,bihw->bohw', wv.reshape(C_out, C_in), xp)

    def unfold(a):
        rows = []
        for kh in range(K):
            cols = []
            for kw in range(K):
                cols.append(a[:, :, kh:kh + H:stride, kw:kw + W:stride])
            rows.append(jnp.stack(cols, axis=-1))
        return jnp.stack(rows, axis=-2)                                # (B,C,H,W,K,K)

    ku, vu = unfold(k), unfold(v)
    half = C_out // 2
    ku = jnp.concatenate([ku[:, :half] + rel_h[None], ku[:, half:] + rel_w[None]], axis=1)
    ku = ku.reshape(B, C_out, H, W, K * K)
    vu = vu.reshape(B, C_out, H, W, K * K)
    logits = q[..., None] * ku
    attn = jax.nn.softmax(logits, axis=-1)
    out = jnp.sum(attn * vu, axis=-1)
    return jnp.where(out >= 0, out, 0.1 * out)


if __name__ == "__main__":
    B, C_in, C_out, H, W, K = 2, 4, 8, 16, 16, 3

    key = jax.random.PRNGKey(0)
    ks = jax.random.split(key, 6)
    x = jax.random.normal(ks[0], (B, C_in, H, W), dtype=jnp.float32)
    # deterministic synthetic parameters (kaiming-like scale for the 1x1 convs)
    wq = jax.random.normal(ks[1], (C_out, C_in, 1, 1), dtype=jnp.float32) * (2.0 / C_out) ** 0.5
    wk = jax.random.normal(ks[2], (C_out, C_in, 1, 1), dtype=jnp.float32) * (2.0 / C_out) ** 0.5
    wv = jax.random.normal(ks[3], (C_out, C_in, 1, 1), dtype=jnp.float32) * (2.0 / C_out) ** 0.5
    rel_h = jax.random.normal(ks[4], (C_out // 2, 1, 1, K, 1), dtype=jnp.float32)
    rel_w = jax.random.normal(ks[5], (C_out // 2, 1, 1, 1, K), dtype=jnp.float32)

    out = attention_conv(x, wq, wk, wv, rel_h, rel_w,
                         kernel_size=K, stride=1, padding=1, groups=4)
    out = jax.block_until_ready(out)

    ref = _reference(x, wq, wk, wv, rel_h, rel_w, K=K, stride=1, padding=1)
    assert out.shape == (B, C_out, H, W)
    assert jnp.allclose(out, ref, rtol=1e-4, atol=1e-5), "mismatch vs reference"

    print("KERNEL_OK")
</pallas_src>

<mosaic_0001>
module attributes {stable_mosaic.version = 11 : i64} {
  func.func @_attention_conv_kernel(%arg0: i32, %arg1: memref<1x4x256xf32, #tpu.memory_space<vmem>>, %arg2: memref<24x4xf32, #tpu.memory_space<vmem>>, %arg3: memref<8x9xf32, #tpu.memory_space<vmem>>, %arg4: memref<9x256xf32, #tpu.memory_space<vmem>>, %arg5: memref<1x8x256xf32, #tpu.memory_space<vmem>>, %arg6: memref<16x512xf32, #tpu.memory_space<vmem>>) attributes {dimension_semantics = [#tpu.dimension_semantics<parallel>], iteration_bounds = array<i64: 2>, scalar_prefetch = 0 : i64, scratch_operands = 1 : i64, tpu.core_type = #tpu.core_type<tc>, window_params = [{transform_indices = @transform_0, window_bounds = array<i64: 1, 4, 256>}, {pipeline_mode = #tpu.pipeline_mode<synchronous>, transform_indices = @transform_1, window_bounds = array<i64: 24, 4>}, {pipeline_mode = #tpu.pipeline_mode<synchronous>, transform_indices = @transform_2, window_bounds = array<i64: 8, 9>}, {pipeline_mode = #tpu.pipeline_mode<synchronous>, transform_indices = @transform_3, window_bounds = array<i64: 9, 256>}, {transform_indices = @transform_4, window_bounds = array<i64: 1, 8, 256>}]} {
    %cst = arith.constant 0.000000e+00 : f32
    %0 = vector.broadcast %cst : f32 to vector<16x128xf32>
    %c0 = arith.constant 0 : index
    %c0_0 = arith.constant 0 : index
    %1 = vector.load %arg6[%c0, %c0_0] : memref<16x512xf32, #tpu.memory_space<vmem>>, vector<16x128xf32>
    tpu.vector_store %arg6[%c0, %c0_0], %0 {strides = array<i32>} : memref<16x512xf32, #tpu.memory_space<vmem>>, vector<16x128xf32>,
    %c0_1 = arith.constant 0 : index
    %c384 = arith.constant 384 : index
    %2 = vector.load %arg6[%c0_1, %c384] : memref<16x512xf32, #tpu.memory_space<vmem>>, vector<16x128xf32>
    tpu.vector_store %arg6[%c0_1, %c384], %0 {strides = array<i32>} : memref<16x512xf32, #tpu.memory_space<vmem>>, vector<16x128xf32>,
    %c0_2 = arith.constant 0 : index
    %c0_3 = arith.constant 0 : index
    %3 = vector.load %arg2[%c0_2, %c0_3] : memref<24x4xf32, #tpu.memory_space<vmem>>, vector<24x4xf32>
    %c0_4 = arith.constant 0 : index
    %c0_5 = arith.constant 0 : index
    %c0_6 = arith.constant 0 : index
    %4 = vector.load %arg1[%c0_4, %c0_5, %c0_6] : memref<1x4x256xf32, #tpu.memory_space<vmem>>, vector<1x4x256xf32>
    %5 = vector.shape_cast %4 : vector<1x4x256xf32> to vector<4x256xf32>
    %cst_7 = arith.constant dense<0.000000e+00> : vector<24x256xf32>
    %6 = tpu.matmul %3, %5, %cst_7 {dimension_numbers = #tpu.dot_dimension_numbers<[1], [0], [0], [1], [0, 0, 1, 1], [], []>} : vector<24x4xf32>, vector<4x256xf32>, vector<24x256xf32> -> vector<24x256xf32>
    %7 = vector.extract_strided_slice %6 {offsets = [0, 0], sizes = [8, 256], strides = [1, 1]} : vector<24x256xf32> to vector<8x256xf32>
    %8 = vector.extract_strided_slice %6 {offsets = [8, 0], sizes = [16, 256], strides = [1, 1]} : vector<24x256xf32> to vector<16x256xf32>
    %c0_8 = arith.constant 0 : index
    %c128 = arith.constant 128 : index
    %9 = vector.load %arg6[%c0_8, %c128] : memref<16x512xf32, #tpu.memory_space<vmem>>, vector<16x256xf32>
    tpu.vector_store %arg6[%c0_8, %c128], %8 {strides = array<i32>} : memref<16x512xf32, #tpu.memory_space<vmem>>, vector<16x256xf32>,
    %c0_9 = arith.constant 0 : index
    %c0_10 = arith.constant 0 : index
    %10 = vector.load %arg3[%c0_9, %c0_10] : memref<8x9xf32, #tpu.memory_space<vmem>>, vector<8x9xf32>
    %c0_11 = arith.constant 0 : index
    %c0_12 = arith.constant 0 : index
    %11 = vector.load %arg4[%c0_11, %c0_12] : memref<9x256xf32, #tpu.memory_space<vmem>>, vector<9x256xf32>
    %c0_13 = arith.constant 0 : index
    %c111 = arith.constant 111 : index
    %12 = vector.load %arg6[%c0_13, %c111] : memref<16x512xf32, #tpu.memory_space<vmem>>, vector<16x256xf32>
    %13 = vector.extract_strided_slice %11 {offsets = [0, 0], sizes = [1, 256], strides = [1, 1]} : vector<9x256xf32> to vector<1x256xf32>
    %cst_14 = arith.constant 5.000000e-01 : f32
    %14 = vector.broadcast %cst_14 : f32 to vector<1x256xf32>
    %15 = arith.cmpf ogt, %13, %14 : vector<1x256xf32>
    %16 = vector.extract_strided_slice %12 {offsets = [0, 0], sizes = [8, 256], strides = [1, 1]} : vector<16x256xf32> to vector<8x256xf32>
    %cst_15 = arith.constant 0.000000e+00 : f32
    %17 = vector.shape_cast %15 : vector<1x256xi1> to vector<1x256xi1>
    %18 = vector.broadcast %17 : vector<1x256xi1> to vector<8x256xi1>
    %19 = vector.broadcast %cst_15 : f32 to vector<8x256xf32>
    %20 = arith.select %18, %16, %19 : vector<8x256xi1>, vector<8x256xf32>
    %21 = vector.extract_strided_slice %10 {offsets = [0, 0], sizes = [8, 1], strides = [1, 1]} : vector<8x9xf32> to vector<8x1xf32>
    %22 = vector.broadcast %21 : vector<8x1xf32> to vector<8x256xf32>
    %23 = arith.addf %20, %22 : vector<8x256xf32>
    %24 = vector.extract_strided_slice %12 {offsets = [8, 0], sizes = [8, 256], strides = [1, 1]} : vector<16x256xf32> to vector<8x256xf32>
    %cst_16 = arith.constant 0.000000e+00 : f32
    %25 = vector.shape_cast %15 : vector<1x256xi1> to vector<1x256xi1>
    %26 = vector.broadcast %25 : vector<1x256xi1> to vector<8x256xi1>
    %27 = vector.broadcast %cst_16 : f32 to vector<8x256xf32>
    %28 = arith.select %26, %24, %27 : vector<8x256xi1>, vector<8x256xf32>
    %29 = arith.mulf %7, %23 : vector<8x256xf32>
    %cst_17 = arith.constant 1.000000e+00 : f32
    %30 = vector.broadcast %cst_17 : f32 to vector<8x256xf32>
    %c0_18 = arith.constant 0 : index
    %c112 = arith.constant 112 : index
    %31 = vector.load %arg6[%c0_18, %c112] : memref<16x512xf32, #tpu.memory_space<vmem>>, vector<16x256xf32>
    %32 = vector.extract_strided_slice %11 {offsets = [1, 0], sizes = [1, 256], strides = [1, 1]} : vector<9x256xf32> to vector<1x256xf32>
    %cst_19 = arith.constant 5.000000e-01 : f32
    %33 = vector.broadcast %cst_19 : f32 to vector<1x256xf32>
    %34 = arith.cmpf ogt, %32, %33 : vector<1x256xf32>
    %35 = vector.extract_strided_slice %31 {offsets = [0, 0], sizes = [8, 256], strides = [1, 1]} : vector<16x256xf32> to vector<8x256xf32>
    %cst_20 = arith.constant 0.000000e+00 : f32
    %36 = vector.shape_cast %34 : vector<1x256xi1> to vector<1x256xi1>
    %37 = vector.broadcast %36 : vector<1x256xi1> to vector<8x256xi1>
    %38 = vector.broadcast %cst_20 : f32 to vector<8x256xf32>
    %39 = arith.select %37, %35, %38 : vector<8x256xi1>, vector<8x256xf32>
    %40 = vector.extract_strided_slice %10 {offsets = [0, 1], sizes = [8, 1], strides = [1, 1]} : vector<8x9xf32> to vector<8x1xf32>
    %41 = vector.broadcast %40 : vector<8x1xf32> to vector<8x256xf32>
    %42 = arith.addf %39, %41 : vector<8x256xf32>
    %43 = vector.extract_strided_slice %31 {offsets = [8, 0], sizes = [8, 256], strides = [1, 1]} : vector<16x256xf32> to vector<8x256xf32>
    %cst_21 = arith.constant 0.000000e+00 : f32
    %44 = vector.shape_cast %34 : vector<1x256xi1> to vector<1x256xi1>
    %45 = vector.broadcast %44 : vector<1x256xi1> to vector<8x256xi1>
    %46 = vector.broadcast %cst_21 : f32 to vector<8x256xf32>
    %47 = arith.select %45, %43, %46 : vector<8x256xi1>, vector<8x256xf32>
    %48 = arith.mulf %7, %42 : vector<8x256xf32>
    %49 = arith.maximumf %29, %48 : vector<8x256xf32>
    %50 = arith.subf %29, %49 : vector<8x256xf32>
    %51 = math.exp %50 : vector<8x256xf32>
    %52 = arith.subf %48, %49 : vector<8x256xf32>
    %53 = math.exp %52 : vector<8x256xf32>
    %54 = arith.mulf %51, %30 : vector<8x256xf32>
    %55 = arith.addf %54, %53 : vector<8x256xf32>
    %56 = arith.mulf %51, %28 : vector<8x256xf32>
    %57 = arith.mulf %53, %47 : vector<8x256xf32>
    %58 = arith.addf %56, %57 : vector<8x256xf32>
    %c0_22 = arith.constant 0 : index
    %c113 = arith.constant 113 : index
    %59 = vector.load %arg6[%c0_22, %c113] : memref<16x512xf32, #tpu.memory_space<vmem>>, vector<16x256xf32>
    %60 = vector.extract_strided_slice %11 {offsets = [2, 0], sizes = [1, 256], strides = [1, 1]} : vector<9x256xf32> to vector<1x256xf32>
    %cst_23 = arith.constant 5.000000e-01 : f32
    %61 = vector.broadcast %cst_23 : f32 to vector<1x256xf32>
    %62 = arith.cmpf ogt, %60, %61 : vector<1x256xf32>
    %63 = vector.extract_strided_slice %59 {offsets = [0, 0], sizes = [8, 256], strides = [1, 1]} : vector<16x256xf32> to vector<8x256xf32>
    %cst_24 = arith.constant 0.000000e+00 : f32
    %64 = vector.shape_cast %62 : vector<1x256xi1> to vector<1x256xi1>
    %65 = vector.broadcast %64 : vector<1x256xi1> to vector<8x256xi1>
    %66 = vector.broadcast %cst_24 : f32 to vector<8x256xf32>
    %67 = arith.select %65, %63, %66 : vector<8x256xi1>, vector<8x256xf32>
    %68 = vector.extract_strided_slice %10 {offsets = [0, 2], sizes = [8, 1], strides = [1, 1]} : vector<8x9xf32> to vector<8x1xf32>
    %69 = vector.broadcast %68 : vector<8x1xf32> to vector<8x256xf32>
    %70 = arith.addf %67, %69 : vector<8x256xf32>
    %71 = vector.extract_strided_slice %59 {offsets = [8, 0], sizes = [8, 256], strides = [1, 1]} : vector<16x256xf32> to vector<8x256xf32>
    %cst_25 = arith.constant 0.000000e+00 : f32
    %72 = vector.shape_cast %62 : vector<1x256xi1> to vector<1x256xi1>
    %73 = vector.broadcast %72 : vector<1x256xi1> to vector<8x256xi1>
    %74 = vector.broadcast %cst_25 : f32 to vector<8x256xf32>
    %75 = arith.select %73, %71, %74 : vector<8x256xi1>, vector<8x256xf32>
    %76 = arith.mulf %7, %70 : vector<8x256xf32>
    %77 = arith.maximumf %49, %76 : vector<8x256xf32>
    %78 = arith.subf %49, %77 : vector<8x256xf32>
    %79 = math.exp %78 : vector<8x256xf32>
    %80 = arith.subf %76, %77 : vector<8x256xf32>
    %81 = math.exp %80 : vector<8x256xf32>
    %82 = arith.mulf %79, %55 : vector<8x256xf32>
    %83 = arith.addf %82, %81 : vector<8x256xf32>
    %84 = arith.mulf %79, %58 : vector<8x256xf32>
    %85 = arith.mulf %81, %75 : vector<8x256xf32>
    %86 = arith.addf %84, %85 : vector<8x256xf32>
    %c0_26 = arith.constant 0 : index
    %c127 = arith.constant 127 : index
    %87 = vector.load %arg6[%c0_26, %c127] : memref<16x512xf32, #tpu.memory_space<vmem>>, vector<16x256xf32>
    %88 = vector.extract_strided_slice %11 {offsets = [3, 0], sizes = [1, 256], strides = [1, 1]} : vector<9x256xf32> to vector<1x256xf32>
    %cst_27 = arith.constant 5.000000e-01 : f32
    %89 = vector.broadcast %cst_27 : f32 to vector<1x256xf32>
    %90 = arith.cmpf ogt, %88, %89 : vector<1x256xf32>
    %91 = vector.extract_strided_slice %87 {offsets = [0, 0], sizes = [8, 256], strides = [1, 1]} : vector<16x256xf32> to vector<8x256xf32>
    %cst_28 = arith.constant 0.000000e+00 : f32
    %92 = vector.shape_cast %90 : vector<1x256xi1> to vector<1x256xi1>
    %93 = vector.broadcast %92 : vector<1x256xi1> to vector<8x256xi1>
    %94 = vector.broadcast %cst_28 : f32 to vector<8x256xf32>
    %95 = arith.select %93, %91, %94 : vector<8x256xi1>, vector<8x256xf32>
    %96 = vector.extract_strided_slice %10 {offsets = [0, 3], sizes = [8, 1], strides = [1, 1]} : vector<8x9xf32> to vector<8x1xf32>
    %97 = vector.broadcast %96 : vector<8x1xf32> to vector<8x256xf32>
    %98 = arith.addf %95, %97 : vector<8x256xf32>
    %99 = vector.extract_strided_slice %87 {offsets = [8, 0], sizes = [8, 256], strides = [1, 1]} : vector<16x256xf32> to vector<8x256xf32>
    %cst_29 = arith.constant 0.000000e+00 : f32
    %100 = vector.shape_cast %90 : vector<1x256xi1> to vector<1x256xi1>
    %101 = vector.broadcast %100 : vector<1x256xi1> to vector<8x256xi1>
    %102 = vector.broadcast %cst_29 : f32 to vector<8x256xf32>
    %103 = arith.select %101, %99, %102 : vector<8x256xi1>, vector<8x256xf32>
    %104 = arith.mulf %7, %98 : vector<8x256xf32>
    %105 = arith.maximumf %77, %104 : vector<8x256xf32>
    %106 = arith.subf %77, %105 : vector<8x256xf32>
    %107 = math.exp %106 : vector<8x256xf32>
    %108 = arith.subf %104, %105 : vector<8x256xf32>
    %109 = math.exp %108 : vector<8x256xf32>
    %110 = arith.mulf %107, %83 : vector<8x256xf32>
    %111 = arith.addf %110, %109 : vector<8x256xf32>
    %112 = arith.mulf %107, %86 : vector<8x256xf32>
    %113 = arith.mulf %109, %103 : vector<8x256xf32>
    %114 = arith.addf %112, %113 : vector<8x256xf32>
    %c0_30 = arith.constant 0 : index
    %c128_31 = arith.constant 128 : index
    %115 = vector.load %arg6[%c0_30, %c128_31] : memref<16x512xf32, #tpu.memory_space<vmem>>, vector<16x256xf32>
    %116 = vector.extract_strided_slice %11 {offsets = [4, 0], sizes = [1, 256], strides = [1, 1]} : vector<9x256xf32> to vector<1x256xf32>
    %cst_32 = arith.constant 5.000000e-01 : f32
    %117 = vector.broadcast %cst_32 : f32 to vector<1x256xf32>
    %118 = arith.cmpf ogt, %116, %117 : vector<1x256xf32>
    %119 = vector.extract_strided_slice %115 {offsets = [0, 0], sizes = [8, 256], strides = [1, 1]} : vector<16x256xf32> to vector<8x256xf32>
    %cst_33 = arith.constant 0.000000e+00 : f32
    %120 = vector.shape_cast %118 : vector<1x256xi1> to vector<1x256xi1>
    %121 = vector.broadcast %120 : vector<1x256xi1> to vector<8x256xi1>
    %122 = vector.broadcast %cst_33 : f32 to vector<8x256xf32>
    %123 = arith.select %121, %119, %122 : vector<8x256xi1>, vector<8x256xf32>
    %124 = vector.extract_strided_slice %10 {offsets = [0, 4], sizes = [8, 1], strides = [1, 1]} : vector<8x9xf32> to vector<8x1xf32>
    %125 = vector.broadcast %124 : vector<8x1xf32> to vector<8x256xf32>
    %126 = arith.addf %123, %125 : vector<8x256xf32>
    %127 = vector.extract_strided_slice %115 {offsets = [8, 0], sizes = [8, 256], strides = [1, 1]} : vector<16x256xf32> to vector<8x256xf32>
    %cst_34 = arith.constant 0.000000e+00 : f32
    %128 = vector.shape_cast %118 : vector<1x256xi1> to vector<1x256xi1>
    %129 = vector.broadcast %128 : vector<1x256xi1> to vector<8x256xi1>
    %130 = vector.broadcast %cst_34 : f32 to vector<8x256xf32>
    %131 = arith.select %129, %127, %130 : vector<8x256xi1>, vector<8x256xf32>
    %132 = arith.mulf %7, %126 : vector<8x256xf32>
    %133 = arith.maximumf %105, %132 : vector<8x256xf32>
    %134 = arith.subf %105, %133 : vector<8x256xf32>
    %135 = math.exp %134 : vector<8x256xf32>
    %136 = arith.subf %132, %133 : vector<8x256xf32>
    %137 = math.exp %136 : vector<8x256xf32>
    %138 = arith.mulf %135, %111 : vector<8x256xf32>
    %139 = arith.addf %138, %137 : vector<8x256xf32>
    %140 = arith.mulf %135, %114 : vector<8x256xf32>
    %141 = arith.mulf %137, %131 : vector<8x256xf32>
    %142 = arith.addf %140, %141 : vector<8x256xf32>
    %c0_35 = arith.constant 0 : index
    %c129 = arith.constant 129 : index
    %143 = vector.load %arg6[%c0_35, %c129] : memref<16x512xf32, #tpu.memory_space<vmem>>, vector<16x256xf32>
    %144 = vector.extract_strided_slice %11 {offsets = [5, 0], sizes = [1, 256], strides = [1, 1]} : vector<9x256xf32> to vector<1x256xf32>
    %cst_36 = arith.constant 5.000000e-01 : f32
    %145 = vector.broadcast %cst_36 : f32 to vector<1x256xf32>
    %146 = arith.cmpf ogt, %144, %145 : vector<1x256xf32>
    %147 = vector.extract_strided_slice %143 {offsets = [0, 0], sizes = [8, 256], strides = [1, 1]} : vector<16x256xf32> to vector<8x256xf32>
    %cst_37 = arith.constant 0.000000e+00 : f32
    %148 = vector.shape_cast %146 : vector<1x256xi1> to vector<1x256xi1>
    %149 = vector.broadcast %148 : vector<1x256xi1> to vector<8x256xi1>
    %150 = vector.broadcast %cst_37 : f32 to vector<8x256xf32>
    %151 = arith.select %149, %147, %150 : vector<8x256xi1>, vector<8x256xf32>
    %152 = vector.extract_strided_slice %10 {offsets = [0, 5], sizes = [8, 1], strides = [1, 1]} : vector<8x9xf32> to vector<8x1xf32>
    %153 = vector.broadcast %152 : vector<8x1xf32> to vector<8x256xf32>
    %154 = arith.addf %151, %153 : vector<8x256xf32>
    %155 = vector.extract_strided_slice %143 {offsets = [8, 0], sizes = [8, 256], strides = [1, 1]} : vector<16x256xf32> to vector<8x256xf32>
    %cst_38 = arith.constant 0.000000e+00 : f32
    %156 = vector.shape_cast %146 : vector<1x256xi1> to vector<1x256xi1>
    %157 = vector.broadcast %156 : vector<1x256xi1> to vector<8x256xi1>
    %158 = vector.broadcast %cst_38 : f32 to vector<8x256xf32>
    %159 = arith.select %157, %155, %158 : vector<8x256xi1>, vector<8x256xf32>
    %160 = arith.mulf %7, %154 : vector<8x256xf32>
    %161 = arith.maximumf %133, %160 : vector<8x256xf32>
    %162 = arith.subf %133, %161 : vector<8x256xf32>
    %163 = math.exp %162 : vector<8x256xf32>
    %164 = arith.subf %160, %161 : vector<8x256xf32>
    %165 = math.exp %164 : vector<8x256xf32>
    %166 = arith.mulf %163, %139 : vector<8x256xf32>
    %167 = arith.addf %166, %165 : vector<8x256xf32>
    %168 = arith.mulf %163, %142 : vector<8x256xf32>
    %169 = arith.mulf %165, %159 : vector<8x256xf32>
    %170 = arith.addf %168, %169 : vector<8x256xf32>
    %c0_39 = arith.constant 0 : index
    %c143 = arith.constant 143 : index
    %171 = vector.load %arg6[%c0_39, %c143] : memref<16x512xf32, #tpu.memory_space<vmem>>, vector<16x256xf32>
    %172 = vector.extract_strided_slice %11 {offsets = [6, 0], sizes = [1, 256], strides = [1, 1]} : vector<9x256xf32> to vector<1x256xf32>
    %cst_40 = arith.constant 5.000000e-01 : f32
    %173 = vector.broadcast %cst_40 : f32 to vector<1x256xf32>
    %174 = arith.cmpf ogt, %172, %173 : vector<1x256xf32>
    %175 = vector.extract_strided_slice %171 {offsets = [0, 0], sizes = [8, 256], strides = [1, 1]} : vector<16x256xf32> to vector<8x256xf32>
    %cst_41 = arith.constant 0.000000e+00 : f32
    %176 = vector.shape_cast %174 : vector<1x256xi1> to vector<1x256xi1>
    %177 = vector.broadcast %176 : vector<1x256xi1> to vector<8x256xi1>
    %178 = vector.broadcast %cst_41 : f32 to vector<8x256xf32>
    %179 = arith.select %177, %175, %178 : vector<8x256xi1>, vector<8x256xf32>
    %180 = vector.extract_strided_slice %10 {offsets = [0, 6], sizes = [8, 1], strides = [1, 1]} : vector<8x9xf32> to vector<8x1xf32>
    %181 = vector.broadcast %180 : vector<8x1xf32> to vector<8x256xf32>
    %182 = arith.addf %179, %181 : vector<8x256xf32>
    %183 = vector.extract_strided_slice %171 {offsets = [8, 0], sizes = [8, 256], strides = [1, 1]} : vector<16x256xf32> to vector<8x256xf32>
    %cst_42 = arith.constant 0.000000e+00 : f32
    %184 = vector.shape_cast %174 : vector<1x256xi1> to vector<1x256xi1>
    %185 = vector.broadcast %184 : vector<1x256xi1> to vector<8x256xi1>
    %186 = vector.broadcast %cst_42 : f32 to vector<8x256xf32>
    %187 = arith.select %185, %183, %186 : vector<8x256xi1>, vector<8x256xf32>
    %188 = arith.mulf %7, %182 : vector<8x256xf32>
    %189 = arith.maximumf %161, %188 : vector<8x256xf32>
    %190 = arith.subf %161, %189 : vector<8x256xf32>
    %191 = math.exp %190 : vector<8x256xf32>
    %192 = arith.subf %188, %189 : vector<8x256xf32>
    %193 = math.exp %192 : vector<8x256xf32>
    %194 = arith.mulf %191, %167 : vector<8x256xf32>
    %195 = arith.addf %194, %193 : vector<8x256xf32>
    %196 = arith.mulf %191, %170 : vector<8x256xf32>
    %197 = arith.mulf %193, %187 : vector<8x256xf32>
    %198 = arith.addf %196, %197 : vector<8x256xf32>
    %c0_43 = arith.constant 0 : index
    %c144 = arith.constant 144 : index
    %199 = vector.load %arg6[%c0_43, %c144] : memref<16x512xf32, #tpu.memory_space<vmem>>, vector<16x256xf32>
    %200 = vector.extract_strided_slice %11 {offsets = [7, 0], sizes = [1, 256], strides = [1, 1]} : vector<9x256xf32> to vector<1x256xf32>
    %cst_44 = arith.constant 5.000000e-01 : f32
    %201 = vector.broadcast %cst_44 : f32 to vector<1x256xf32>
    %202 = arith.cmpf ogt, %200, %201 : vector<1x256xf32>
    %203 = vector.extract_strided_slice %199 {offsets = [0, 0], sizes = [8, 256], strides = [1, 1]} : vector<16x256xf32> to vector<8x256xf32>
    %cst_45 = arith.constant 0.000000e+00 : f32
    %204 = vector.shape_cast %202 : vector<1x256xi1> to vector<1x256xi1>
    %205 = vector.broadcast %204 : vector<1x256xi1> to vector<8x256xi1>
    %206 = vector.broadcast %cst_45 : f32 to vector<8x256xf32>
    %207 = arith.select %205, %203, %206 : vector<8x256xi1>, vector<8x256xf32>
    %208 = vector.extract_strided_slice %10 {offsets = [0, 7], sizes = [8, 1], strides = [1, 1]} : vector<8x9xf32> to vector<8x1xf32>
    %209 = vector.broadcast %208 : vector<8x1xf32> to vector<8x256xf32>
    %210 = arith.addf %207, %209 : vector<8x256xf32>
    %211 = vector.extract_strided_slice %199 {offsets = [8, 0], sizes = [8, 256], strides = [1, 1]} : vector<16x256xf32> to vector<8x256xf32>
    %cst_46 = arith.constant 0.000000e+00 : f32
    %212 = vector.shape_cast %202 : vector<1x256xi1> to vector<1x256xi1>
    %213 = vector.broadcast %212 : vector<1x256xi1> to vector<8x256xi1>
    %214 = vector.broadcast %cst_46 : f32 to vector<8x256xf32>
    %215 = arith.select %213, %211, %214 : vector<8x256xi1>, vector<8x256xf32>
    %216 = arith.mulf %7, %210 : vector<8x256xf32>
    %217 = arith.maximumf %189, %216 : vector<8x256xf32>
    %218 = arith.subf %189, %217 : vector<8x256xf32>
    %219 = math.exp %218 : vector<8x256xf32>
    %220 = arith.subf %216, %217 : vector<8x256xf32>
    %221 = math.exp %220 : vector<8x256xf32>
    %222 = arith.mulf %219, %195 : vector<8x256xf32>
    %223 = arith.addf %222, %221 : vector<8x256xf32>
    %224 = arith.mulf %219, %198 : vector<8x256xf32>
    %225 = arith.mulf %221, %215 : vector<8x256xf32>
    %226 = arith.addf %224, %225 : vector<8x256xf32>
    %c0_47 = arith.constant 0 : index
    %c145 = arith.constant 145 : index
    %227 = vector.load %arg6[%c0_47, %c145] : memref<16x512xf32, #tpu.memory_space<vmem>>, vector<16x256xf32>
    %228 = vector.extract_strided_slice %11 {offsets = [8, 0], sizes = [1, 256], strides = [1, 1]} : vector<9x256xf32> to vector<1x256xf32>
    %cst_48 = arith.constant 5.000000e-01 : f32
    %229 = vector.broadcast %cst_48 : f32 to vector<1x256xf32>
    %230 = arith.cmpf ogt, %228, %229 : vector<1x256xf32>
    %231 = vector.extract_strided_slice %227 {offsets = [0, 0], sizes = [8, 256], strides = [1, 1]} : vector<16x256xf32> to vector<8x256xf32>
    %cst_49 = arith.constant 0.000000e+00 : f32
    %232 = vector.shape_cast %230 : vector<1x256xi1> to vector<1x256xi1>
    %233 = vector.broadcast %232 : vector<1x256xi1> to vector<8x256xi1>
    %234 = vector.broadcast %cst_49 : f32 to vector<8x256xf32>
    %235 = arith.select %233, %231, %234 : vector<8x256xi1>, vector<8x256xf32>
    %236 = vector.extract_strided_slice %10 {offsets = [0, 8], sizes = [8, 1], strides = [1, 1]} : vector<8x9xf32> to vector<8x1xf32>
    %237 = vector.broadcast %236 : vector<8x1xf32> to vector<8x256xf32>
    %238 = arith.addf %235, %237 : vector<8x256xf32>
    %239 = vector.extract_strided_slice %227 {offsets = [8, 0], sizes = [8, 256], strides = [1, 1]} : vector<16x256xf32> to vector<8x256xf32>
    %cst_50 = arith.constant 0.000000e+00 : f32
    %240 = vector.shape_cast %230 : vector<1x256xi1> to vector<1x256xi1>
    %241 = vector.broadcast %240 : vector<1x256xi1> to vector<8x256xi1>
    %242 = vector.broadcast %cst_50 : f32 to vector<8x256xf32>
    %243 = arith.select %241, %239, %242 : vector<8x256xi1>, vector<8x256xf32>
    %244 = arith.mulf %7, %238 : vector<8x256xf32>
    %245 = arith.maximumf %217, %244 : vector<8x256xf32>
    %246 = arith.subf %217, %245 : vector<8x256xf32>
    %247 = math.exp %246 : vector<8x256xf32>
    %248 = arith.subf %244, %245 : vector<8x256xf32>
    %249 = math.exp %248 : vector<8x256xf32>
    %250 = arith.mulf %247, %223 : vector<8x256xf32>
    %251 = arith.addf %250, %249 : vector<8x256xf32>
    %252 = arith.mulf %247, %226 : vector<8x256xf32>
    %253 = arith.mulf %249, %243 : vector<8x256xf32>
    %254 = arith.addf %252, %253 : vector<8x256xf32>
    %255 = tpu.reciprocal %251 {approx = true} : vector<8x256xf32> -> vector<8x256xf32>
    %256 = arith.mulf %251, %255 : vector<8x256xf32>
    %cst_51 = arith.constant 2.000000e+00 : f32
    %257 = vector.broadcast %cst_51 : f32 to vector<8x256xf32>
    %258 = arith.subf %257, %256 : vector<8x256xf32>
    %259 = arith.mulf %255, %258 : vector<8x256xf32>
    %260 = arith.mulf %254, %259 : vector<8x256xf32>
    %cst_52 = arith.constant 1.000000e-01 : f32
    %261 = vector.broadcast %cst_52 : f32 to vector<8x256xf32>
    %262 = arith.mulf %261, %260 : vector<8x256xf32>
    %263 = arith.maximumf %260, %262 : vector<8x256xf32>
    %c0_53 = arith.constant 0 : index
    %c0_54 = arith.constant 0 : index
    %c0_55 = arith.constant 0 : index
    %264 = vector.load %arg5[%c0_53, %c0_54, %c0_55] : memref<1x8x256xf32, #tpu.memory_space<vmem>>, vector<1x8x256xf32>
    %265 = vector.shape_cast %264 : vector<1x8x256xf32> to vector<8x256xf32>
    %266 = vector.shape_cast %263 : vector<8x256xf32> to vector<1x8x256xf32>
    tpu.vector_store %arg5[%c0_53, %c0_54, %c0_55], %266 {strides = array<i32>} : memref<1x8x256xf32, #tpu.memory_space<vmem>>, vector<1x8x256xf32>,
    return
  }
  func.func @transform_0(%arg0: i32) -> (i32, i32, i32) {
    %c0_i32 = arith.constant 0 : i32
    %c0_i32_0 = arith.constant 0 : i32
    %c0_i32_1 = arith.constant 0 : i32
    return %arg0, %c0_i32, %c0_i32_0 : i32, i32, i32
  }
  func.func @transform_1(%arg0: i32) -> (i32, i32) {
    %c0_i32 = arith.constant 0 : i32
    %c0_i32_0 = arith.constant 0 : i32
    %c0_i32_1 = arith.constant 0 : i32
    return %c0_i32, %c0_i32_0 : i32, i32
  }
  func.func @transform_2(%arg0: i32) -> (i32, i32) {
    %c0_i32 = arith.constant 0 : i32
    %c0_i32_0 = arith.constant 0 : i32
    %c0_i32_1 = arith.constant 0 : i32
    return %c0_i32, %c0_i32_0 : i32, i32
  }
  func.func @transform_3(%arg0: i32) -> (i32, i32) {
    %c0_i32 = arith.constant 0 : i32
    %c0_i32_0 = arith.constant 0 : i32
    %c0_i32_1 = arith.constant 0 : i32
    return %c0_i32, %c0_i32_0 : i32, i32
  }
  func.func @transform_4(%arg0: i32) -> (i32, i32, i32) {
    %c0_i32 = arith.constant 0 : i32
    %c0_i32_0 = arith.constant 0 : i32
    %c0_i32_1 = arith.constant 0 : i32
    return %arg0, %c0_i32, %c0_i32_0 : i32, i32, i32
  }
}

</mosaic_0001>

<llo_original>
// kernel: tpu_custom_call.1
$region0: #{tpu_custom_call.1}
  #allocation0 [shape = 'u32[]', space=smem, size = 0x4, offset = 0x4, fixed_abs, tag = 'smem constant byte address 0x4 - core index']
  #allocation1 [shape = 'u32[144,128]{1,0:T(1,128)}', space=vmem, size = 0x12000, scoped, tag = 'internal scratch']
  #allocation2 [shape = 'f32[16,512]{1,0:T(8,128)}', space=vmem, size = 0x8000, scoped, tag = 'scratch operand']
  %s0 = inlined_call_operand.hbm [shape: f32[2,4,256], index: 0, kind: input, shape index: {}]
  %s1 = inlined_call_operand.vmem [shape: f32[24,4], index: 1, kind: input, shape index: {}]
  %s2 = inlined_call_operand.hbm [shape: f32[8,9], index: 2, kind: input, shape index: {}]
  %s3 = inlined_call_operand.vmem [shape: f32[9,256], index: 3, kind: input, shape index: {}]
  %s4 = inlined_call_operand.hbm [shape: f32[2,8,256], index: 4, kind: output, shape index: {}]
  %s5 = sld [smem:[#allocation0]]
  $region57: #{tpu_custom_call.1} parent=0
    _
  %s7 = ssub.s32 1, %s5
  %s8 = scalar_select 0, %s7, %s5
  $region1: #{tpu_custom_call.1} parent=0
    #allocation3 [shape = 'u8[8192]{0}', space=vmem, size = 0x2000, scoped, tag = 'input window, operand 0']
    #allocation4 [shape = 's32[2]{0}', space=sflag, size = 0x8, scoped, tag = 'scoped memory for tpu_custom_call.1']
    #allocation5 [shape = 's32[2]{0}', space=sflag, size = 0x8, scoped, tag = 'scoped memory for tpu_custom_call.1']
    #allocation6 [shape = 'u8[4096]{0}', space=vmem, size = 0x1000, scoped, tag = 'input window, operand 2, single buffered']
    #allocation7 [shape = 's32[1]{0}', space=sflag, size = 0x4, scoped, tag = 'scoped memory for tpu_custom_call.1']
    #allocation8 [shape = 'u8[16384]{0}', space=vmem, size = 0x4000, scoped, tag = 'output window, operand 0']
    %9 = vsyncpa [#allocation4], 0
    %s10 = scalar_lea.sflag [#allocation4], 1
    %11 = vsyncpa %s10, 0
    %12 = vsyncpa [#allocation7], 0
    %13 = vsyncpa [#allocation5], 0
    %s14 = scalar_lea.sflag [#allocation5], 1
    %15 = vsyncpa %s14, 0
    loop: start=0, step=1, limit=4
    $region2: #{tpu_custom_call.1} parent=1 // loop_pre_header
      _
    $region3: #{tpu_custom_call.1} parent=1 // loop_header
      %s17 = sphi 0, %s21
      %p18 = scmp.ge.s32.totalorder %s17, 4
      %s27 = sphi 0, %s29
      %s30 = sphi 0, %s27
      %s31 = sphi 0, %s30
      %s47 = sphi 0, %s31
      %s51 = sphi 0, %s51
      %s53 = sphi 0, %s51
      %s54 = sphi 0, %s53
      %s68 = sphi 0, %s54
      %s72 = sphi 0, %s72
      %s74 = sphi 0, %s72
      %s75 = sphi 0, %s74
      %s89 = sphi 0, %s75
      %s93 = sphi 0, %s93
      %s95 = sphi 0, %s93
      %s96 = sphi 0, %s95
      %s110 = sphi 0, %s96
      %s116 = sphi 0, %s118
      %s119 = sphi 0, %s116
      %s120 = sphi 0, %s119
      %s136 = sphi 0, %s120
    $region4: #{tpu_custom_call.1} parent=1 // loop_header_branch
      %20 = sbr.rel (%p18) target = $region8
    $region5: #{tpu_custom_call.1} parent=1 // loop_body
      %s22 = ssub.s32 %s17, 1
      %s23 = ssub.s32 %s17, 2
      %s24 = sadd.s32 %s17, 1
      %s25 = ssub.s32 %s17, %s24
      %p26 = scmp.eq.s32.totalorder %s25, 0
      %s28 = sadd.s32 %s27, 1
      %s29 = scalar_select %p26, %s27, %s28
      %p32 = pneg %p26
      %p33 = scmp.eq.s32.totalorder %s17, 1
      %p34 = por %p32, %p33
      %p35 = scmp.ne.s32.totalorder %s27, %s30
      %p36 = scmp.eq.s32.totalorder %s17, 0
      %p37 = por %p35, %p36
      %p38 = scmp.ne.s32.totalorder %s27, %s30
      %p39 = scmp.eq.s32.totalorder %s22, 1
      %p40 = por %p38, %p39
      %p41 = scmp.ne.s32.totalorder %s30, %s31
      %p42 = scmp.eq.s32.totalorder %s22, 0
      %p43 = por %p41, %p42
      %p44 = scmp.ne.s32.totalorder %s30, %s31
      %p45 = scmp.eq.s32.totalorder %s23, 1
      %p46 = por %p44, %p45
      %p48 = scmp.ne.s32.totalorder %s31, %s47
      %p49 = scmp.eq.s32.totalorder %s23, 0
      %p50 = por %p48, %p49
      %s52 = sadd.s32 %s51, 1
      %p55 = scmp.eq.s32.totalorder %s17, 1
      %p56 = scmp.ne.s32.totalorder %s51, %s53
      %p57 = scmp.eq.s32.totalorder %s17, 0
      %p58 = por %p56, %p57
      %p59 = scmp.ne.s32.totalorder %s51, %s53
      %p60 = scmp.eq.s32.totalorder %s22, 1
      %p61 = por %p59, %p60
      %p62 = scmp.ne.s32.totalorder %s53, %s54
      %p63 = scmp.eq.s32.totalorder %s22, 0
      %p64 = por %p62, %p63
      %p65 = scmp.ne.s32.totalorder %s53, %s54
      %p66 = scmp.eq.s32.totalorder %s23, 1
      %p67 = por %p65, %p66
      %p69 = scmp.ne.s32.totalorder %s54, %s68
      %p70 = scmp.eq.s32.totalorder %s23, 0
      %p71 = por %p69, %p70
      %s73 = sadd.s32 %s72, 1
      %p76 = scmp.eq.s32.totalorder %s17, 1
      %p77 = scmp.ne.s32.totalorder %s72, %s74
      %p78 = scmp.eq.s32.totalorder %s17, 0
      %p79 = por %p77, %p78
      %p80 = scmp.ne.s32.totalorder %s72, %s74
      %p81 = scmp.eq.s32.totalorder %s22, 1
      %p82 = por %p80, %p81
      %p83 = scmp.ne.s32.totalorder %s74, %s75
      %p84 = scmp.eq.s32.totalorder %s22, 0
      %p85 = por %p83, %p84
      %p86 = scmp.ne.s32.totalorder %s74, %s75
      %p87 = scmp.eq.s32.totalorder %s23, 1
      %p88 = por %p86, %p87
      %p90 = scmp.ne.s32.totalorder %s75, %s89
      %p91 = scmp.eq.s32.totalorder %s23, 0
      %p92 = por %p90, %p91
      %s94 = sadd.s32 %s93, 1
      %p97 = scmp.eq.s32.totalorder %s17, 1
      %p98 = scmp.ne.s32.totalorder %s93, %s95
      %p99 = scmp.eq.s32.totalorder %s17, 0
      %p100 = por %p98, %p99
      %p101 = scmp.ne.s32.totalorder %s93, %s95
      %p102 = scmp.eq.s32.totalorder %s22, 1
      %p103 = por %p101, %p102
      %p104 = scmp.ne.s32.totalorder %s95, %s96
      %p105 = scmp.eq.s32.totalorder %s22, 0
      %p106 = por %p104, %p105
      %p107 = scmp.ne.s32.totalorder %s95, %s96
      %p108 = scmp.eq.s32.totalorder %s23, 1
      %p109 = por %p107, %p108
      %p111 = scmp.ne.s32.totalorder %s96, %s110
      %p112 = scmp.eq.s32.totalorder %s23, 0
      %p113 = por %p111, %p112
      %s114 = ssub.s32 %s17, %s24
      %p115 = scmp.eq.s32.totalorder %s114, 0
      %s117 = sadd.s32 %s116, 1
      %s118 = scalar_select %p115, %s116, %s117
      %p121 = pneg %p115
      %p122 = scmp.eq.s32.totalorder %s17, 1
      %p123 = por %p121, %p122
      %p124 = scmp.ne.s32.totalorder %s116, %s119
      %p125 = scmp.eq.s32.totalorder %s17, 0
      %p126 = por %p124, %p125
      %p127 = scmp.ne.s32.totalorder %s116, %s119
      %p128 = scmp.eq.s32.totalorder %s22, 1
      %p129 = por %p127, %p128
      %p130 = scmp.ne.s32.totalorder %s119, %s120
      %p131 = scmp.eq.s32.totalorder %s22, 0
      %p132 = por %p130, %p131
      %p133 = scmp.ne.s32.totalorder %s119, %s120
      %p134 = scmp.eq.s32.totalorder %s23, 1
      %p135 = por %p133, %p134
      %p137 = scmp.ne.s32.totalorder %s120, %s136
      %p138 = scmp.eq.s32.totalorder %s23, 0
      %p139 = por %p137, %p138
      %p140 = scmp.le.s32.totalorder 1, %s17
      %p141 = scmp.lt.s32.totalorder %s17, 3
      %p142 = pnand %p140, %p141
      %p143 = pneg %p142
      // Predicated region
      $region9: #{tpu_custom_call.1} parent=5 // pred_check
        _
      $region10: #{tpu_custom_call.1} parent=5 // pred_check_branch
        %145 = sbr.rel (%p142) target = $region12
      $region11: #{tpu_custom_call.1} parent=5 // pred_region
        %s146 = ssub.s32 %s17, 1
        // Predicated region
        $region13: #{tpu_custom_call.1} parent=11 // pred_check
          %p147 = pneg %p64
        $region14: #{tpu_custom_call.1} parent=11 // pred_check_branch
          %149 = sbr.rel (%p147) target = $region16
        $region15: #{tpu_custom_call.1} parent=11 // pred_region
          _
        $region16: #{tpu_custom_call.1} parent=11 // pred_fallthru
          _
        // Predicated region
        $region17: #{tpu_custom_call.1} parent=11 // pred_check
          %p150 = pneg %p85
        $region18: #{tpu_custom_call.1} parent=11 // pred_check_branch
          %152 = sbr.rel (%p150) target = $region20
        $region19: #{tpu_custom_call.1} parent=11 // pred_region
          %s154 = ssub.s32 128, 128
          %155 = vsyncadd [#allocation7], %s154
          %s157 = sshll.u32 [#allocation6], 4
          %s158 = int_to_ptr.vmem [resolvable:$true] %s157
          %160 = dma.hbm_to_vmem [thread:$0]  %s2, 128, %s158, [#allocation7]
        $region20: #{tpu_custom_call.1} parent=11 // pred_fallthru
          _
        // Predicated region
        $region21: #{tpu_custom_call.1} parent=11 // pred_check
          %p161 = pneg %p106
        $region22: #{tpu_custom_call.1} parent=11 // pred_check_branch
          %163 = sbr.rel (%p161) target = $region24
        $region23: #{tpu_custom_call.1} parent=11 // pred_region
          _
        $region24: #{tpu_custom_call.1} parent=11 // pred_fallthru
          _
      $region12: #{tpu_custom_call.1} parent=5 // pred_fallthru
        _
      %p164 = scmp.lt.s32.totalorder %s17, 2
      // Predicated region
      $region25: #{tpu_custom_call.1} parent=5 // pred_check
        %p165 = pneg %p164
      $region26: #{tpu_custom_call.1} parent=5 // pred_check_branch
        %167 = sbr.rel (%p165) target = $region28
      $region27: #{tpu_custom_call.1} parent=5 // pred_region
        // Predicated region
        $region29: #{tpu_custom_call.1} parent=27 // pred_check
          %p168 = pneg %p37
        $region30: #{tpu_custom_call.1} parent=27 // pred_check_branch
          %170 = sbr.rel (%p168) target = $region32
        $region31: #{tpu_custom_call.1} parent=27 // pred_region
          %s171 = sand.u32 %s27, 1
          %s172 = scalar_lea.sflag [#allocation4], %s171
          %s173 = sand.u32 %s27, 1
          %s174 = smul.addr %s173, 8
          %s175 = scalar_lea.vmem [#allocation3], %s174
          %s177 = ssub.s32 128, 128
          %178 = vsyncadd %s172, %s177
          %s179 = smul.addr %s17, 2
          %s180 = smul.addr %s179, 64
          %s181 = scalar_lea.hbm %s0, %s180
          %s183 = sshll.u32 %s175, 4
          %s184 = int_to_ptr.vmem [resolvable:$true] %s183
          %186 = dma.hbm_to_vmem [thread:$0]  %s181, 128, %s184, %s172
        $region32: #{tpu_custom_call.1} parent=27 // pred_fallthru
          _
      $region28: #{tpu_custom_call.1} parent=5 // pred_fallthru
        _
      %p187 = scmp.le.s32.totalorder 1, %s17
      %p188 = scmp.lt.s32.totalorder %s17, 3
      %p189 = pnand %p187, %p188
      %p190 = pneg %p189
      // Predicated region
      $region33: #{tpu_custom_call.1} parent=5 // pred_check
        _
      $region34: #{tpu_custom_call.1} parent=5 // pred_check_branch
        %192 = sbr.rel (%p189) target = $region36
      $region35: #{tpu_custom_call.1} parent=5 // pred_region
        %s193 = ssub.s32 %s17, 1
        %s194 = sand.u32 %s30, 1
        %s195 = scalar_lea.sflag [#allocation4], %s194
        %s196 = sand.u32 %s30, 1
        %s197 = smul.addr %s196, 8
        %s198 = scalar_lea.vmem [#allocation3], %s197
        // Predicated region
        $region37: #{tpu_custom_call.1} parent=35 // pred_check
          %p199 = pneg %p43
        $region38: #{tpu_custom_call.1} parent=35 // pred_check_branch
          %201 = sbr.rel (%p199) target = $region40
        $region39: #{tpu_custom_call.1} parent=35 // pred_region
          %202 = dma.done %s195, 128
        $region40: #{tpu_custom_call.1} parent=35 // pred_fallthru
          _
        // Predicated region
        $region41: #{tpu_custom_call.1} parent=35 // pred_check
          %p203 = pneg %p85
        $region42: #{tpu_custom_call.1} parent=35 // pred_check_branch
          %205 = sbr.rel (%p203) target = $region44
        $region43: #{tpu_custom_call.1} parent=35 // pred_region
          %206 = dma.done [#allocation7], 128
        $region44: #{tpu_custom_call.1} parent=35 // pred_fallthru
          _
        %s207 = sand.u32 %s30, 1
        %s208 = scalar_lea.sflag [#allocation4], %s207
        %s209 = sand.u32 %s30, 1
        %s210 = smul.addr %s209, 8
        %s211 = scalar_lea.vmem [#allocation3], %s210
        %p212 = pneg %p43
        %p213 = pneg %p40
        %p214 = pneg %p64
        %p215 = pneg %p61
        %p216 = pneg %p85
        %p217 = pneg %p82
        %p218 = pneg %p106
        %p219 = pneg %p103
        %p220 = pneg %p132
        %p221 = pneg %p129
        %s222 = sand.u32 %s119, 1
        %s223 = scalar_lea.sflag [#allocation5], %s222
        %s224 = sand.u32 %s119, 1
        %s225 = smul.addr %s224, 16
        %s226 = scalar_lea.vmem [#allocation8], %s225
        %227 = vst [vmem:[#allocation2] sm:$0xff] 0.0
        %228 = vst [vmem:[#allocation2 + $0x20] sm:$0xff] 0.0
        %229 = vst [vmem:[#allocation2 + $0x18] sm:$0xff] 0.0
        %230 = vst [vmem:[#allocation2 + $0x38] sm:$0xff] 0.0
        %v231 = vld [vmem:[%s1] sm:$0xff]
        %v232 = vld [vmem:[%s1 + $0x8] sm:$0xff]
        %v233 = vld [vmem:[%s1 + $0x10] sm:$0xff]
        %v234 = vld [vmem:[%s198] sm:$0xff]
        %v236 = vcombine.high %v234, %v234
        %vm237 = vcmask 31744
        %v239 = vsel %vm237, %v231, 0
        %v242 = vsel %vm237, %v232, 0
        %v245 = vsel %vm237, %v233, 0
        %vm247 = vcmask 1043456
        %v248 = vsel %vm247, %v234, 0
        %v250 = vsel %vm247, %v236, 0
        %252 = vmatprep.subr.mxu0 0.0
        %253 = vmatpush1.msra.mxu0 0.0
        %254 = vmatprep.subr.mxu0 0.0
        %255 = vmatpush1.msra.mxu0 0.0
        %256 = vmatprep.subr.mxu0 0.0
        %257 = vmatpush1.msra.mxu0 0.0
        %258 = vmatprep.subr.mxu0 0.0
        %259 = vmatpush1.msra.mxu0 0.0
        %260 = vmatprep.subr.mxu0 0.0
        %261 = vmatpush1.msra.mxu0 0.0
        %262 = vmatprep.subr.mxu0 0.0
        %263 = vmatpush1.msra.mxu0 0.0
        %264 = vmatprep.subr.mxu0 0.0
        %265 = vmatpush1.msra.mxu0 0.0
        %266 = vmatprep.subr.mxu0 0.0
        %267 = vmatpush1.msra.mxu0 0.0
        %268 = vmatprep.subr.mxu0 0.0
        %269 = vmatpush1.msra.mxu0 0.0
        %270 = vmatprep.subr.mxu0 0.0
        %271 = vmatpush1.msra.mxu0 0.0
        %272 = vmatprep.subr.mxu0 0.0
        %273 = vmatpush1.msra.mxu0 0.0
        %274 = vmatprep.subr.mxu0 0.0
        %275 = vmatpush1.msra.mxu0 0.0
        %276 = vmatprep.subr.mxu0 0.0
        %277 = vmatpush1.msra.mxu0 0.0
        %278 = vmatprep.subr.mxu0 0.0
        %279 = vmatpush1.msra.mxu0 0.0
        %280 = vmatprep.subr.mxu0 0.0
        %281 = vmatpush1.msra.mxu0 0.0
        %282 = vmatprep.subr.mxu0 %v250
        %283 = vmatpush1.msra.mxu0 %v248
        %284 = vmatprep.subr.mxu0 0.0
        %285 = vmatpush2.msra.mxu0 0.0
        %286 = vmatprep.subr.mxu0 0.0
        %287 = vmatpush2.msra.mxu0 0.0
        %288 = vmatprep.subr.mxu0 0.0
        %289 = vmatpush2.msra.mxu0 0.0
        %290 = vmatprep.subr.mxu0 0.0
        %291 = vmatpush2.msra.mxu0 0.0
        %292 = vmatprep.subr.mxu0 0.0
        %293 = vmatpush2.msra.mxu0 0.0
        %294 = vmatprep.subr.mxu0 0.0
        %295 = vmatpush2.msra.mxu0 0.0
        %296 = vmatprep.subr.mxu0 0.0
        %297 = vmatpush2.msra.mxu0 0.0
        %298 = vmatprep.subr.mxu0 0.0
        %299 = vmatpush2.msra.mxu0 0.0
        %300 = vmatprep.subr.mxu0 0.0
        %301 = vmatpush2.msra.mxu0 0.0
        %302 = vmatprep.subr.mxu0 0.0
        %303 = vmatpush2.msra.mxu0 0.0
        %304 = vmatprep.subr.mxu0 0.0
        %305 = vmatpush2.msra.mxu0 0.0
        %306 = vmatprep.subr.mxu0 0.0
        %307 = vmatpush2.msra.mxu0 0.0
        %308 = vmatprep.subr.mxu0 0.0
        %309 = vmatpush2.msra.mxu0 0.0
        %310 = vmatprep.subr.mxu0 0.0
        %311 = vmatpush2.msra.mxu0 0.0
        %312 = vmatprep.subr.mxu0 0.0
        %313 = vmatpush2.msra.mxu0 0.0
        %314 = vmatprep.subr.mxu0 0.0
        %315 = vmatpush2.msra.mxu0 0.0
        %316 = vmatprep.mubr.f32.mxu0 0.0
        %317 = vmatmul.mubr.f32.gmra.mxu0 %v239
        %v318 = vpop.f32.mrf.mxu0
        %v319 = vadd.f32 0.0, %v318
        %v320 = vpop.f32.mrf.mxu0
        %v321 = vadd.f32 0.0, %v320
        %322 = vmatprep.mubr.f32.mxu0 0.0
        %323 = vmatmul.mubr.f32.gmra.mxu0 %v242
        %v324 = vpop.f32.mrf.mxu0
        %v325 = vadd.f32 0.0, %v324
        %v326 = vpop.f32.mrf.mxu0
        %v327 = vadd.f32 0.0, %v326
        %328 = vmatprep.mubr.f32.mxu0 0.0
        %329 = vmatmul.mubr.f32.gmra.mxu0 %v245
        %v330 = vpop.f32.mrf.mxu0
        %v331 = vadd.f32 0.0, %v330
        %v332 = vpop.f32.mrf.mxu0
        %v333 = vadd.f32 0.0, %v332
        %334 = vdwg.mxu0
        %335 = vst [vmem:[#allocation2 + $0x8] sm:$0xff] %v325
        %336 = vst [vmem:[#allocation2 + $0x10] sm:$0xff] %v327
        %337 = vst [vmem:[#allocation2 + $0x28] sm:$0xff] %v331
        %338 = vst [vmem:[#allocation2 + $0x30] sm:$0xff] %v333
        %v339 = vld [vmem:[#allocation6] sm:$0xff]
        %v340 = vld [vmem:[%s3] sm:$0xff]
        %v341 = vld [vmem:[%s3 + $0x8] sm:$0xff]
        %v342 = vld [vmem:[%s3 + $0x10] sm:$0x1]
        %v343 = vld [vmem:[%s3 + $0x18] sm:$0x1]
        %v344 = vld [vmem:[#allocation2] sm:$0xff]
        %v345 = vld [vmem:[#allocation2 + $0x8] sm:$0xff]
        %v346 = vld [vmem:[#allocation2 + $0x10] sm:$0xff]
        %v347 = vld [vmem:[#allocation2 + $0x20] sm:$0xff]
        %v348 = vld [vmem:[#allocation2 + $0x28] sm:$0xff]
        %v349 = vld [vmem:[#allocation2 + $0x30] sm:$0xff]
        %vm350 = vcmp.gt.f32.partialorder %v340, 0.5
        %vm351 = vcmp.gt.f32.partialorder %v341, 0.5
        %v352 = vsel %vm350, 1, 0
        %v353 = vsel %vm351, 1, 0
        %v354 = vlaneseq
        %v355 = vshrl.u32 %v354, 7
        %v356 = vsub.s32 0, %v355
        %v357 = vrot.slane %v352, %v356
        %v358 = vlaneseq
        %v359 = vshrl.u32 %v358, 7
        %v360 = vsub.s32 0, %v359
        %v361 = vrot.slane %v353, %v360
        %vm362 = vcmp.eq.s32.totalorder %v357, 1
        %vm363 = vcmp.eq.s32.totalorder %v361, 1
        %367 = vrot.lane.b32.xlu0 %v344, 17
        %v368 = vpop.permute.xlu0 %367
        %369 = vrot.lane.b32.xlu0 %v345, 17
        %v370 = vpop.permute.xlu0 %369
        %371 = vrot.lane.b32.xlu0 %v346, 17
        %v372 = vpop.permute.xlu0 %371
        %vm373 = vcmask 138240
        %v374 = vsel %vm373, %v368, %v370
        %v375 = vsel %vm373, %v370, %v372
        %v378 = vsel %vm362, %v374, 0.0
        %v379 = vsel %vm363, %v375, 0.0
        %381 = vset.pattern.permute.xlu0 0
        %382 = vperm.xlu0 %381, %v339
        %v383 = vpop.permute.xlu0 %382
        %v385 = vadd.f32 %v378, %v383
        %v386 = vadd.f32 %v379, %v383
        %390 = vrot.lane.b32.xlu0 %v347, 17
        %v391 = vpop.permute.xlu0 %390
        %392 = vrot.lane.b32.xlu0 %v348, 17
        %v393 = vpop.permute.xlu0 %392
        %394 = vrot.lane.b32.xlu0 %v349, 17
        %v395 = vpop.permute.xlu0 %394
        %v396 = vsel %vm373, %v391, %v393
        %v397 = vsel %vm373, %v393, %v395
        %v400 = vsel %vm362, %v396, 0.0
        %v401 = vsel %vm363, %v397, 0.0
        %v402 = vmul.f32 %v319, %v385
        %v403 = vmul.f32 %v321, %v386
        %v404 = vlaneseq
        %v405 = vshrl.u32 %v404, 7
        %v406 = vsub.s32 1, %v405
        %v407 = vrot.slane %v352, %v406
        %v408 = vlaneseq
        %v409 = vshrl.u32 %v408, 7
        %v410 = vsub.s32 1, %v409
        %v411 = vrot.slane %v353, %v410
        %vm412 = vcmp.eq.s32.totalorder %v407, 1
        %vm413 = vcmp.eq.s32.totalorder %v411, 1
        %414 = vrot.lane.b32.xlu0 %v344, 16
        %v415 = vpop.permute.xlu0 %414
        %416 = vrot.lane.b32.xlu0 %v345, 16
        %v417 = vpop.permute.xlu0 %416
        %418 = vrot.lane.b32.xlu0 %v346, 16
        %v419 = vpop.permute.xlu0 %418
        %vm420 = vcmask 130048
        %v421 = vsel %vm420, %v415, %v417
        %v422 = vsel %vm420, %v417, %v419
        %v425 = vsel %vm412, %v421, 0.0
        %v426 = vsel %vm413, %v422, 0.0
        %427 = vset.pattern.permute.xlu0 1
        %428 = vperm.xlu0 %427, %v339
        %v429 = vpop.permute.xlu0 %428
        %v431 = vadd.f32 %v425, %v429
        %v432 = vadd.f32 %v426, %v429
        %433 = vrot.lane.b32.xlu0 %v347, 16
        %v434 = vpop.permute.xlu0 %433
        %435 = vrot.lane.b32.xlu0 %v348, 16
        %v436 = vpop.permute.xlu0 %435
        %437 = vrot.lane.b32.xlu0 %v349, 16
        %v438 = vpop.permute.xlu0 %437
        %v439 = vsel %vm420, %v434, %v436
        %v440 = vsel %vm420, %v436, %v438
        %v443 = vsel %vm412, %v439, 0.0
        %v444 = vsel %vm413, %v440, 0.0
        %v445 = vmul.f32 %v319, %v431
        %v446 = vmul.f32 %v321, %v432
        %v447 = vmax.f32 %v402, %v445
        %v448 = vmax.f32 %v403, %v446
        %v449 = vsub.f32 %v402, %v447
        %v450 = vsub.f32 %v403, %v448
        %v451 = vmul.f32 %v449, 1.442695
        %v452 = vpow.pop %v451
        %v453 = vmul.f32 %v450, 1.442695
        %v454 = vpow.pop %v453
        %v455 = vsub.f32 %v445, %v447
        %v456 = vsub.f32 %v446, %v448
        %v457 = vmul.f32 %v455, 1.442695
        %v458 = vpow.pop %v457
        %v459 = vmul.f32 %v456, 1.442695
        %v460 = vpow.pop %v459
        %v461 = vadd.f32 %v452, %v458
        %v462 = vadd.f32 %v454, %v460
        %v463 = vmul.f32 %v452, %v400
        %v464 = vmul.f32 %v454, %v401
        %v465 = vmul.f32 %v458, %v443
        %v466 = vmul.f32 %v460, %v444
        %v467 = vadd.f32 %v463, %v465
        %v468 = vadd.f32 %v464, %v466
        %v469 = vlaneseq
        %v470 = vshrl.u32 %v469, 7
        %v471 = vsub.s32 2, %v470
        %v472 = vrot.slane %v352, %v471
        %v473 = vlaneseq
        %v474 = vshrl.u32 %v473, 7
        %v475 = vsub.s32 2, %v474
        %v476 = vrot.slane %v353, %v475
        %vm477 = vcmp.eq.s32.totalorder %v472, 1
        %vm478 = vcmp.eq.s32.totalorder %v476, 1
        %479 = vrot.lane.b32.xlu0 %v344, 15
        %v480 = vpop.permute.xlu0 %479
        %481 = vrot.lane.b32.xlu0 %v345, 15
        %v482 = vpop.permute.xlu0 %481
        %483 = vrot.lane.b32.xlu0 %v346, 15
        %v484 = vpop.permute.xlu0 %483
        %vm485 = vcmask 121856
        %v486 = vsel %vm485, %v480, %v482
        %v487 = vsel %vm485, %v482, %v484
        %v490 = vsel %vm477, %v486, 0.0
        %v491 = vsel %vm478, %v487, 0.0
        %492 = vset.pattern.permute.xlu0 2
        %493 = vperm.xlu0 %492, %v339
        %v494 = vpop.permute.xlu0 %493
        %v496 = vadd.f32 %v490, %v494
        %v497 = vadd.f32 %v491, %v494
        %498 = vrot.lane.b32.xlu0 %v347, 15
        %v499 = vpop.permute.xlu0 %498
        %500 = vrot.lane.b32.xlu0 %v348, 15
        %v501 = vpop.permute.xlu0 %500
        %502 = vrot.lane.b32.xlu0 %v349, 15
        %v503 = vpop.permute.xlu0 %502
        %v504 = vsel %vm485, %v499, %v501
        %v505 = vsel %vm485, %v501, %v503
        %v508 = vsel %vm477, %v504, 0.0
        %v509 = vsel %vm478, %v505, 0.0
        %v510 = vmul.f32 %v319, %v496
        %v511 = vmul.f32 %v321, %v497
        %v512 = vmax.f32 %v447, %v510
        %v513 = vmax.f32 %v448, %v511
        %v514 = vsub.f32 %v447, %v512
        %v515 = vsub.f32 %v448, %v513
        %v516 = vmul.f32 %v514, 1.442695
        %v517 = vpow.pop %v516
        %v518 = vmul.f32 %v515, 1.442695
        %v519 = vpow.pop %v518
        %v520 = vsub.f32 %v510, %v512
        %v521 = vsub.f32 %v511, %v513
        %v522 = vmul.f32 %v520, 1.442695
        %v523 = vpow.pop %v522
        %v524 = vmul.f32 %v521, 1.442695
        %v525 = vpow.pop %v524
        %v526 = vmul.f32 %v517, %v461
        %v527 = vmul.f32 %v519, %v462
        %v528 = vadd.f32 %v526, %v523
        %v529 = vadd.f32 %v527, %v525
        %v530 = vmul.f32 %v517, %v467
        %v531 = vmul.f32 %v519, %v468
        %v532 = vmul.f32 %v523, %v508
        %v533 = vmul.f32 %v525, %v509
        %v534 = vadd.f32 %v530, %v532
        %v535 = vadd.f32 %v531, %v533
        %v536 = vlaneseq
        %v537 = vshrl.u32 %v536, 7
        %v538 = vsub.s32 3, %v537
        %v539 = vrot.slane %v352, %v538
        %v540 = vlaneseq
        %v541 = vshrl.u32 %v540, 7
        %v542 = vsub.s32 3, %v541
        %v543 = vrot.slane %v353, %v542
        %vm544 = vcmp.eq.s32.totalorder %v539, 1
        %vm545 = vcmp.eq.s32.totalorder %v543, 1
        %546 = vrot.lane.b32.xlu0 %v344, 1
        %v547 = vpop.permute.xlu0 %546
        %548 = vrot.lane.b32.xlu0 %v345, 1
        %v549 = vpop.permute.xlu0 %548
        %550 = vrot.lane.b32.xlu0 %v346, 1
        %v551 = vpop.permute.xlu0 %550
        %vm552 = vcmask 7168
        %v553 = vsel %vm552, %v547, %v549
        %v554 = vsel %vm552, %v549, %v551
        %v557 = vsel %vm544, %v553, 0.0
        %v558 = vsel %vm545, %v554, 0.0
        %559 = vset.pattern.permute.xlu0 3
        %560 = vperm.xlu0 %559, %v339
        %v561 = vpop.permute.xlu0 %560
        %v563 = vadd.f32 %v557, %v561
        %v564 = vadd.f32 %v558, %v561
        %565 = vrot.lane.b32.xlu0 %v347, 1
        %v566 = vpop.permute.xlu0 %565
        %567 = vrot.lane.b32.xlu0 %v348, 1
        %v568 = vpop.permute.xlu0 %567
        %569 = vrot.lane.b32.xlu0 %v349, 1
        %v570 = vpop.permute.xlu0 %569
        %v571 = vsel %vm552, %v566, %v568
        %v572 = vsel %vm552, %v568, %v570
        %v575 = vsel %vm544, %v571, 0.0
        %v576 = vsel %vm545, %v572, 0.0
        %v577 = vmul.f32 %v319, %v563
        %v578 = vmul.f32 %v321, %v564
        %v579 = vmax.f32 %v512, %v577
        %v580 = vmax.f32 %v513, %v578
        %v581 = vsub.f32 %v512, %v579
        %v582 = vsub.f32 %v513, %v580
        %v583 = vmul.f32 %v581, 1.442695
        %v584 = vpow.pop %v583
        %v585 = vmul.f32 %v582, 1.442695
        %v586 = vpow.pop %v585
        %v587 = vsub.f32 %v577, %v579
        %v588 = vsub.f32 %v578, %v580
        %v589 = vmul.f32 %v587, 1.442695
        %v590 = vpow.pop %v589
        %v591 = vmul.f32 %v588, 1.442695
        %v592 = vpow.pop %v591
        %v593 = vmul.f32 %v584, %v528
        %v594 = vmul.f32 %v586, %v529
        %v595 = vadd.f32 %v593, %v590
        %v596 = vadd.f32 %v594, %v592
        %v597 = vmul.f32 %v584, %v534
        %v598 = vmul.f32 %v586, %v535
        %v599 = vmul.f32 %v590, %v575
        %v600 = vmul.f32 %v592, %v576
        %v601 = vadd.f32 %v597, %v599
        %v602 = vadd.f32 %v598, %v600
        %v603 = vlaneseq
        %v604 = vshrl.u32 %v603, 7
        %v605 = vsub.s32 4, %v604
        %v606 = vrot.slane %v352, %v605
        %v607 = vlaneseq
        %v608 = vshrl.u32 %v607, 7
        %v609 = vsub.s32 4, %v608
        %v610 = vrot.slane %v353, %v609
        %vm611 = vcmp.eq.s32.totalorder %v606, 1
        %vm612 = vcmp.eq.s32.totalorder %v610, 1
        %v613 = vsel %vm611, %v345, 0.0
        %v614 = vsel %vm612, %v346, 0.0
        %615 = vset.pattern.permute.xlu0 4
        %616 = vperm.xlu0 %615, %v339
        %v617 = vpop.permute.xlu0 %616
        %v619 = vadd.f32 %v613, %v617
        %v620 = vadd.f32 %v614, %v617
        %v621 = vsel %vm611, %v348, 0.0
        %v622 = vsel %vm612, %v349, 0.0
        %v623 = vmul.f32 %v319, %v619
        %v624 = vmul.f32 %v321, %v620
        %v625 = vmax.f32 %v579, %v623
        %v626 = vmax.f32 %v580, %v624
        %v627 = vsub.f32 %v579, %v625
        %v628 = vsub.f32 %v580, %v626
        %v629 = vmul.f32 %v627, 1.442695
        %v630 = vpow.pop %v629
        %v631 = vmul.f32 %v628, 1.442695
        %v632 = vpow.pop %v631
        %v633 = vsub.f32 %v623, %v625
        %v634 = vsub.f32 %v624, %v626
        %v635 = vmul.f32 %v633, 1.442695
        %v636 = vpow.pop %v635
        %v637 = vmul.f32 %v634, 1.442695
        %v638 = vpow.pop %v637
        %v639 = vmul.f32 %v630, %v595
        %v640 = vmul.f32 %v632, %v596
        %v641 = vadd.f32 %v639, %v636
        %v642 = vadd.f32 %v640, %v638
        %v643 = vmul.f32 %v630, %v601
        %v644 = vmul.f32 %v632, %v602
        %v645 = vmul.f32 %v636, %v621
        %v646 = vmul.f32 %v638, %v622
        %v647 = vadd.f32 %v643, %v645
        %v648 = vadd.f32 %v644, %v646
        %v649 = vld [vmem:[#allocation2 + $0x8] sm:$0xff]
        %v650 = vld [vmem:[#allocation2 + $0x10] sm:$0xff]
        %v651 = vld [vmem:[#allocation2 + $0x18] sm:$0xff]
        %v652 = vld [vmem:[#allocation2 + $0x28] sm:$0xff]
        %v653 = vld [vmem:[#allocation2 + $0x30] sm:$0xff]
        %v654 = vld [vmem:[#allocation2 + $0x38] sm:$0xff]
        %v655 = vlaneseq
        %v656 = vshrl.u32 %v655, 7
        %v657 = vsub.s32 5, %v656
        %v658 = vrot.slane %v352, %v657
        %v659 = vlaneseq
        %v660 = vshrl.u32 %v659, 7
        %v661 = vsub.s32 5, %v660
        %v662 = vrot.slane %v353, %v661
        %vm663 = vcmp.eq.s32.totalorder %v658, 1
        %vm664 = vcmp.eq.s32.totalorder %v662, 1
        %668 = vrot.lane.b32.xlu0 %v649, 127
        %v669 = vpop.permute.xlu0 %668
        %670 = vrot.lane.b32.xlu0 %v650, 127
        %v671 = vpop.permute.xlu0 %670
        %672 = vrot.lane.b32.xlu0 %v651, 127
        %v673 = vpop.permute.xlu0 %672
        %vm674 = vcmask 1039360
        %v675 = vsel %vm674, %v669, %v671
        %v676 = vsel %vm674, %v671, %v673
        %v679 = vsel %vm663, %v675, 0.0
        %v680 = vsel %vm664, %v676, 0.0
        %681 = vset.pattern.permute.xlu0 5
        %682 = vperm.xlu0 %681, %v339
        %v683 = vpop.permute.xlu0 %682
        %v685 = vadd.f32 %v679, %v683
        %v686 = vadd.f32 %v680, %v683
        %690 = vrot.lane.b32.xlu0 %v652, 127
        %v691 = vpop.permute.xlu0 %690
        %692 = vrot.lane.b32.xlu0 %v653, 127
        %v693 = vpop.permute.xlu0 %692
        %694 = vrot.lane.b32.xlu0 %v654, 127
        %v695 = vpop.permute.xlu0 %694
        %v696 = vsel %vm674, %v691, %v693
        %v697 = vsel %vm674, %v693, %v695
        %v700 = vsel %vm663, %v696, 0.0
        %v701 = vsel %vm664, %v697, 0.0
        %v702 = vmul.f32 %v319, %v685
        %v703 = vmul.f32 %v321, %v686
        %v704 = vmax.f32 %v625, %v702
        %v705 = vmax.f32 %v626, %v703
        %v706 = vsub.f32 %v625, %v704
        %v707 = vsub.f32 %v626, %v705
        %v708 = vmul.f32 %v706, 1.442695
        %v709 = vpow.pop %v708
        %v710 = vmul.f32 %v707, 1.442695
        %v711 = vpow.pop %v710
        %v712 = vsub.f32 %v702, %v704
        %v713 = vsub.f32 %v703, %v705
        %v714 = vmul.f32 %v712, 1.442695
        %v715 = vpow.pop %v714
        %v716 = vmul.f32 %v713, 1.442695
        %v717 = vpow.pop %v716
        %v718 = vmul.f32 %v709, %v641
        %v719 = vmul.f32 %v711, %v642
        %v720 = vadd.f32 %v718, %v715
        %v721 = vadd.f32 %v719, %v717
        %v722 = vmul.f32 %v709, %v647
        %v723 = vmul.f32 %v711, %v648
        %v724 = vmul.f32 %v715, %v700
        %v725 = vmul.f32 %v717, %v701
        %v726 = vadd.f32 %v722, %v724
        %v727 = vadd.f32 %v723, %v725
        %v728 = vlaneseq
        %v729 = vshrl.u32 %v728, 7
        %v730 = vsub.s32 6, %v729
        %v731 = vrot.slane %v352, %v730
        %v732 = vlaneseq
        %v733 = vshrl.u32 %v732, 7
        %v734 = vsub.s32 6, %v733
        %v735 = vrot.slane %v353, %v734
        %vm736 = vcmp.eq.s32.totalorder %v731, 1
        %vm737 = vcmp.eq.s32.totalorder %v735, 1
        %738 = vrot.lane.b32.xlu0 %v649, 113
        %v739 = vpop.permute.xlu0 %738
        %740 = vrot.lane.b32.xlu0 %v650, 113
        %v741 = vpop.permute.xlu0 %740
        %742 = vrot.lane.b32.xlu0 %v651, 113
        %v743 = vpop.permute.xlu0 %742
        %vm744 = vcmask 924672
        %v745 = vsel %vm744, %v739, %v741
        %v746 = vsel %vm744, %v741, %v743
        %v749 = vsel %vm736, %v745, 0.0
        %v750 = vsel %vm737, %v746, 0.0
        %751 = vset.pattern.permute.xlu0 6
        %752 = vperm.xlu0 %751, %v339
        %v753 = vpop.permute.xlu0 %752
        %v755 = vadd.f32 %v749, %v753
        %v756 = vadd.f32 %v750, %v753
        %757 = vrot.lane.b32.xlu0 %v652, 113
        %v758 = vpop.permute.xlu0 %757
        %759 = vrot.lane.b32.xlu0 %v653, 113
        %v760 = vpop.permute.xlu0 %759
        %761 = vrot.lane.b32.xlu0 %v654, 113
        %v762 = vpop.permute.xlu0 %761
        %v763 = vsel %vm744, %v758, %v760
        %v764 = vsel %vm744, %v760, %v762
        %v767 = vsel %vm736, %v763, 0.0
        %v768 = vsel %vm737, %v764, 0.0
        %v769 = vmul.f32 %v319, %v755
        %v770 = vmul.f32 %v321, %v756
        %v771 = vmax.f32 %v704, %v769
        %v772 = vmax.f32 %v705, %v770
        %v773 = vsub.f32 %v704, %v771
        %v774 = vsub.f32 %v705, %v772
        %v775 = vmul.f32 %v773, 1.442695
        %v776 = vpow.pop %v775
        %v777 = vmul.f32 %v774, 1.442695
        %v778 = vpow.pop %v777
        %v779 = vsub.f32 %v769, %v771
        %v780 = vsub.f32 %v770, %v772
        %v781 = vmul.f32 %v779, 1.442695
        %v782 = vpow.pop %v781
        %v783 = vmul.f32 %v780, 1.442695
        %v784 = vpow.pop %v783
        %v785 = vmul.f32 %v776, %v720
        %v786 = vmul.f32 %v778, %v721
        %v787 = vadd.f32 %v785, %v782
        %v788 = vadd.f32 %v786, %v784
        %v789 = vmul.f32 %v776, %v726
        %v790 = vmul.f32 %v778, %v727
        %v791 = vmul.f32 %v782, %v767
        %v792 = vmul.f32 %v784, %v768
        %v793 = vadd.f32 %v789, %v791
        %v794 = vadd.f32 %v790, %v792
        %v795 = vlaneseq
        %v796 = vshrl.u32 %v795, 7
        %v797 = vsub.s32 7, %v796
        %v798 = vrot.slane %v352, %v797
        %v799 = vlaneseq
        %v800 = vshrl.u32 %v799, 7
        %v801 = vsub.s32 7, %v800
        %v802 = vrot.slane %v353, %v801
        %vm803 = vcmp.eq.s32.totalorder %v798, 1
        %vm804 = vcmp.eq.s32.totalorder %v802, 1
        %805 = vrot.lane.b32.xlu0 %v649, 112
        %v806 = vpop.permute.xlu0 %805
        %807 = vrot.lane.b32.xlu0 %v650, 112
        %v808 = vpop.permute.xlu0 %807
        %809 = vrot.lane.b32.xlu0 %v651, 112
        %v810 = vpop.permute.xlu0 %809
        %vm811 = vcmask 916480
        %v812 = vsel %vm811, %v806, %v808
        %v813 = vsel %vm811, %v808, %v810
        %v816 = vsel %vm803, %v812, 0.0
        %v817 = vsel %vm804, %v813, 0.0
        %818 = vset.pattern.permute.xlu0 7
        %819 = vperm.xlu0 %818, %v339
        %v820 = vpop.permute.xlu0 %819
        %v822 = vadd.f32 %v816, %v820
        %v823 = vadd.f32 %v817, %v820
        %824 = vrot.lane.b32.xlu0 %v652, 112
        %v825 = vpop.permute.xlu0 %824
        %826 = vrot.lane.b32.xlu0 %v653, 112
        %v827 = vpop.permute.xlu0 %826
        %828 = vrot.lane.b32.xlu0 %v654, 112
        %v829 = vpop.permute.xlu0 %828
        %v830 = vsel %vm811, %v825, %v827
        %v831 = vsel %vm811, %v827, %v829
        %v834 = vsel %vm803, %v830, 0.0
        %v835 = vsel %vm804, %v831, 0.0
        %v836 = vmul.f32 %v319, %v822
        %v837 = vmul.f32 %v321, %v823
        %v838 = vmax.f32 %v771, %v836
        %v839 = vmax.f32 %v772, %v837
        %v840 = vsub.f32 %v771, %v838
        %v841 = vsub.f32 %v772, %v839
        %v842 = vmul.f32 %v840, 1.442695
        %v843 = vpow.pop %v842
        %v844 = vmul.f32 %v841, 1.442695
        %v845 = vpow.pop %v844
        %v846 = vsub.f32 %v836, %v838
        %v847 = vsub.f32 %v837, %v839
        %v848 = vmul.f32 %v846, 1.442695
        %v849 = vpow.pop %v848
        %v850 = vmul.f32 %v847, 1.442695
        %v851 = vpow.pop %v850
        %v852 = vmul.f32 %v843, %v787
        %v853 = vmul.f32 %v845, %v788
        %v854 = vadd.f32 %v852, %v849
        %v855 = vadd.f32 %v853, %v851
        %v856 = vmul.f32 %v843, %v793
        %v857 = vmul.f32 %v845, %v794
        %v858 = vmul.f32 %v849, %v834
        %v859 = vmul.f32 %v851, %v835
        %v860 = vadd.f32 %v856, %v858
        %v861 = vadd.f32 %v857, %v859
        %vm862 = vcmp.gt.f32.partialorder %v342, 0.5
        %vm863 = vcmp.gt.f32.partialorder %v343, 0.5
        %v864 = vsel %vm862, 1, 0
        %v865 = vsel %vm863, 1, 0
        %v866 = vlaneseq
        %v867 = vshrl.u32 %v866, 7
        %v868 = vsub.s32 0, %v867
        %v869 = vrot.slane %v864, %v868
        %v870 = vlaneseq
        %v871 = vshrl.u32 %v870, 7
        %v872 = vsub.s32 0, %v871
        %v873 = vrot.slane %v865, %v872
        %vm874 = vcmp.eq.s32.totalorder %v869, 1
        %vm875 = vcmp.eq.s32.totalorder %v873, 1
        %876 = vrot.lane.b32.xlu0 %v649, 111
        %v877 = vpop.permute.xlu0 %876
        %878 = vrot.lane.b32.xlu0 %v650, 111
        %v879 = vpop.permute.xlu0 %878
        %880 = vrot.lane.b32.xlu0 %v651, 111
        %v881 = vpop.permute.xlu0 %880
        %vm882 = vcmask 908288
        %v883 = vsel %vm882, %v877, %v879
        %v884 = vsel %vm882, %v879, %v881
        %v887 = vsel %vm874, %v883, 0.0
        %v888 = vsel %vm875, %v884, 0.0
        %889 = vset.pattern.permute.xlu0 8
        %890 = vperm.xlu0 %889, %v339
        %v891 = vpop.permute.xlu0 %890
        %v893 = vadd.f32 %v887, %v891
        %v894 = vadd.f32 %v888, %v891
        %895 = vrot.lane.b32.xlu0 %v652, 111
        %v896 = vpop.permute.xlu0 %895
        %897 = vrot.lane.b32.xlu0 %v653, 111
        %v898 = vpop.permute.xlu0 %897
        %899 = vrot.lane.b32.xlu0 %v654, 111
        %v900 = vpop.permute.xlu0 %899
        %v901 = vsel %vm882, %v896, %v898
        %v902 = vsel %vm882, %v898, %v900
        %v905 = vsel %vm874, %v901, 0.0
        %v906 = vsel %vm875, %v902, 0.0
        %v907 = vmul.f32 %v319, %v893
        %v908 = vmul.f32 %v321, %v894
        %v909 = vmax.f32 %v838, %v907
        %v910 = vmax.f32 %v839, %v908
        %v911 = vsub.f32 %v838, %v909
        %v912 = vsub.f32 %v839, %v910
        %v913 = vmul.f32 %v911, 1.442695
        %v914 = vpow.pop %v913
        %v915 = vmul.f32 %v912, 1.442695
        %v916 = vpow.pop %v915
        %v917 = vsub.f32 %v907, %v909
        %v918 = vsub.f32 %v908, %v910
        %v919 = vmul.f32 %v917, 1.442695
        %v920 = vpow.pop %v919
        %v921 = vmul.f32 %v918, 1.442695
        %v922 = vpow.pop %v921
        %v923 = vmul.f32 %v914, %v854
        %v924 = vmul.f32 %v916, %v855
        %v925 = vadd.f32 %v923, %v920
        %v926 = vadd.f32 %v924, %v922
        %v927 = vmul.f32 %v914, %v860
        %v928 = vmul.f32 %v916, %v861
        %v929 = vmul.f32 %v920, %v905
        %v930 = vmul.f32 %v922, %v906
        %v931 = vadd.f32 %v927, %v929
        %v932 = vadd.f32 %v928, %v930
        %v933 = vrcp.pop %v925
        %v934 = vrcp.pop %v926
        %v935 = vmul.f32 %v925, %v933
        %v936 = vmul.f32 %v926, %v934
        %v937 = vsub.f32 2.0, %v935
        %v938 = vsub.f32 2.0, %v936
        %v939 = vmul.f32 %v933, %v937
        %v940 = vmul.f32 %v934, %v938
        %v941 = vmul.f32 %v931, %v939
        %v942 = vmul.f32 %v932, %v940
        %v943 = vmul.f32 %v941, 0.1
        %v944 = vmul.f32 %v942, 0.1
        %v945 = vmax.f32 %v941, %v943
        %v946 = vmax.f32 %v942, %v944
        %947 = vst [vmem:[%s226] sm:$0xff] %v945
        %948 = vst [vmem:[%s226 + $0x8] sm:$0xff] %v946
        %s949 = sand.u32 %s119, 1
        %s950 = scalar_lea.sflag [#allocation5], %s949
        %s951 = sand.u32 %s119, 1
        %s952 = smul.addr %s951, 16
        %s953 = scalar_lea.vmem [#allocation8], %s952
        // Predicated region
        $region45: #{tpu_custom_call.1} parent=35 // pred_check
          %p954 = pneg %p129
        $region46: #{tpu_custom_call.1} parent=35 // pred_check_branch
          %956 = sbr.rel (%p954) target = $region48
        $region47: #{tpu_custom_call.1} parent=35 // pred_region
          %s958 = ssub.s32 256, 256
          %959 = vsyncadd %s950, %s958
          %s960 = smul.addr %s22, 2
          %s961 = smul.addr %s960, 128
          %s962 = scalar_lea.hbm %s4, %s961
          %s964 = sshll.u32 %s953, 4
          %s965 = int_to_ptr.vmem [resolvable:$true] %s964
          %967 = dma.vmem_to_hbm [thread:$0]  %s965, 256, %s962, %s950
        $region48: #{tpu_custom_call.1} parent=35 // pred_fallthru
          _
      $region36: #{tpu_custom_call.1} parent=5 // pred_fallthru
        _
      %p968 = scmp.le.s32.totalorder 2, %s17
      // Predicated region
      $region49: #{tpu_custom_call.1} parent=5 // pred_check
        %p969 = pneg %p968
      $region50: #{tpu_custom_call.1} parent=5 // pred_check_branch
        %971 = sbr.rel (%p969) target = $region52
      $region51: #{tpu_custom_call.1} parent=5 // pred_region
        %s972 = ssub.s32 %s17, 2
        // Predicated region
        $region53: #{tpu_custom_call.1} parent=51 // pred_check
          %p973 = pneg %p135
        $region54: #{tpu_custom_call.1} parent=51 // pred_check_branch
          %975 = sbr.rel (%p973) target = $region56
        $region55: #{tpu_custom_call.1} parent=51 // pred_region
          %s976 = sand.u32 %s120, 1
          %s977 = scalar_lea.sflag [#allocation5], %s976
          %s978 = sand.u32 %s120, 1
          %s979 = smul.addr %s978, 16
          %s980 = scalar_lea.vmem [#allocation8], %s979
          %981 = dma.done %s977, 256
        $region56: #{tpu_custom_call.1} parent=51 // pred_fallthru
          _
      $region52: #{tpu_custom_call.1} parent=5 // pred_fallthru
        _
    $region6: #{tpu_custom_call.1} parent=1 // loop_footer
      %s21 = sadd.s32 1, %s17
    $region7: #{tpu_custom_call.1} parent=1 // loop_footer_branch
      %16 = sbr.rel target = $region3
    $region8: #{tpu_custom_call.1} parent=1 // loop_exit
      _
    %982 = vsyncpa [#allocation4], 1
    %s983 = scalar_lea.sflag [#allocation4], 1
    %984 = vsyncpa %s983, 1
    %985 = vsyncpa [#allocation7], 1
    %986 = vsyncpa [#allocation5], 1
    %s987 = scalar_lea.sflag [#allocation5], 1
    %988 = vsyncpa %s987, 1

</llo_original>
